<compile_context>
chip_gen: v5e
topology: v5e:2x2
jax: 0.10.0
libtpu: 0.0.40
codegen_flags: <defaults>
</compile_context>

<pallas_src>
import functools

import numpy as np

import jax
import jax.numpy as jnp
from jax.experimental import pallas as pl
from jax.experimental.pallas import tpu as pltpu

EPSILON2 = 0.001


def _round_up(a, b):
    return (a + b - 1) // b * b


def _pick_group(t):
    for g in (8, 4, 2):
        if t % g == 0:
            return g
    return 1


def _pick_m_chunk(t, bt, nt, budget_bytes=64 * 1024):
    """Largest chunk of the m axis whose (mc, Bt, Nt) slab stays <= budget."""
    mc = max(1, min(t, budget_bytes // (bt * nt * 4)))
    while t % mc != 0:
        mc -= 1
    return int(mc)


def _until_kernel(xi_ref, xo_ref, l1_ref, w2_ref, o_ref, *, group, m_chunk):
    """One (batch-tile, node-tile) block of the UntilLayer forward.

    m-leading / t-leading layouts so both Product reductions are leading-axis
    VPU folds (no XLU cross-lane work) and output stores are unmasked.

    xi_ref : (T, Bt, Nt)  x_input[b, m, n]       (m leading)
    xo_ref : (T, Bt, Nt)  x_input_other[b, t, n] (t leading)
    l1_ref : (T, T, Nt)   Weight_layer1[t, m, n] (sigmoid table)
    w2_ref : (T, Nt)      Weight[m, n]           (sigmoid table)
    o_ref  : (Bt, Nt)     out[b, n]
    """
    T = xi_ref.shape[0]
    p2 = None  # running Product_m term, shape (Bt, Nt)

    # The m axis is processed in chunks of `m_chunk` rows so the fused t-fold's
    # live set (a few (mc, Bt, Nt) slabs) stays within the 64-vreg file.
    for m0 in range(0, T, m_chunk):
        mc = m_chunk

        # ---- inner Product over t, fused: no (Bt, T, T, Nt) tensor exists ----
        # s1[mm, b, n] = sum_t log(1 - (1 - xo[b, t, n]) * L1[t, m0+mm, n])
        # `group` t-terms are folded with cheap VPU multiplies (pairwise, for
        # ILP) before each EUP log -> only T/group transcendentals per element.
        s1 = None
        for g0 in range(0, T, group):
            prod_g = None
            pair = None
            for t in range(g0, g0 + group):
                omx = 1.0 - xo_ref[t]                               # (Bt, Nt)
                l1s = l1_ref[t, m0:m0 + mc, :]                      # (mc, Nt)
                term = 1.0 - omx[None, :, :] * l1s[:, None, :]      # (mc, Bt, Nt)
                if pair is None:
                    pair = term
                else:
                    pair = pair * term
                    prod_g = pair if prod_g is None else prod_g * pair
                    pair = None
            if pair is not None:                                    # odd-group tail
                prod_g = pair if prod_g is None else prod_g * pair
            lg = jnp.log(prod_g)
            s1 = lg if s1 is None else s1 + lg

        # Product(X) = -1/(-1 + sum log X)
        y1 = -pl.reciprocal(s1 - 1.0, approx=False)                 # x_input_layer2
        u = xi_ref[m0:m0 + mc, :, :] * y1                           # x_until_input
        t2 = 1.0 - u * w2_ref[m0:m0 + mc, :][:, None, :]            # (mc, Bt, Nt)

        # Fold the chunk's m rows into the running product: leading-axis,
        # pure VPU multiplies (no sublane/XLU reduction).
        for mm in range(mc):
            row = t2[mm]
            p2 = row if p2 is None else p2 * row

    # Outer Product over m. Terms stay in (0, 1], so full product + a single
    # log per output element is safe (underflow -> log = -inf -> out = 1, the
    # same limit the reference sum-of-logs converges to).
    s2 = jnp.log(p2)
    o_ref[...] = (1.0 + pl.reciprocal(s2 - 1.0, approx=False)).astype(o_ref.dtype)


@functools.partial(jax.jit, static_argnames=("bin1", "bin_t"))
def until_forward(x, bound1, bound2, *, bin1, bin_t):
    """Pallas forward of UntilLayer.  x: (B, P*bin1*bin_t), bound*: (output_dim,).

    Note: UntilLayer.forward never applies the use_not concatenation itself,
    so x is consumed exactly as given (matching the PyTorch module).
    """
    f32 = jnp.float32
    B, D = x.shape
    Q, T = int(bin1), int(bin_t)
    assert D % (Q * T) == 0, "input_dim must be a multiple of bin1 * bin_t"
    P = D // (Q * T)
    N = P * Q * (Q - 1)                      # == input_dim * (bin1 - 1) // bin_t
    assert bound1.shape == (N,) and bound2.shape == (N,)

    # ---- static node -> (patch, j, k) tables; node order matches torch.cat ----
    p_arr = np.repeat(np.arange(P), Q * (Q - 1))
    j_arr = np.tile(np.repeat(np.arange(Q), Q - 1), P)
    k_arr = np.tile(np.array([k for j in range(Q) for k in range(Q) if k != j]), P)
    pj_idx = jnp.asarray(p_arr * Q + j_arr, dtype=jnp.int32)      # (N,)
    pk_idx = jnp.asarray(p_arr * Q + k_arr, dtype=jnp.int32)      # (N,)

    # ---- gather per-node time series; time-leading, lane-dense node layout ----
    # x column p*Q*T + t*Q + q  ->  xq[b, p*Q + q, t]
    xq = jnp.transpose(x.astype(f32).reshape(B, P, T, Q), (0, 1, 3, 2)).reshape(B, P * Q, T)
    xi = jnp.transpose(jnp.take(xq, pj_idx, axis=1), (2, 0, 1))   # (T, B, N)  [m, b, n]
    xo = jnp.transpose(jnp.take(xq, pk_idx, axis=1), (2, 0, 1))   # (T, B, N)  [t, b, n]

    # ---- parameter-derived sigmoid tables (computed once, not per batch tile) ----
    b1 = bound1.astype(f32)
    b2 = bound2.astype(f32)
    w_end = 0.5 * (jnp.abs(b1 - b2) + jnp.abs(b1 + b2))           # (N,)
    w_start = w_end - jnp.abs(b1 - b2)                            # (N,)
    l = jnp.arange(T, dtype=f32)
    t_g = l[:, None, None]                                        # t axis
    m_g = l[None, :, None]                                        # m axis
    l1 = jax.nn.sigmoid((t_g - w_start[None, None, :]) * (m_g - EPSILON2 - t_g))        # (T, T, N)
    w2 = jax.nn.sigmoid((l[:, None] - w_start[None, :]) * (w_end[None, :] - l[:, None]))  # (T, N)

    # ---- tile sizes: (8, 128)-aligned blocks, whole T reduction per block ----
    Bt = min(_round_up(B, 8), 64)
    Nt = min(512 if Bt <= 16 else 256, _round_up(N, 128))        # bound vreg slabs
    # v7x megacore: keep >= 2 "parallel" grid steps whenever the problem allows.
    if _round_up(B, Bt) // Bt == 1 and _round_up(N, Nt) // Nt == 1:
        if B > 8 and Bt > 8:
            Bt = max(8, _round_up((B + 1) // 2, 8))
        elif N > 128 and Nt > 128:
            Nt = max(128, _round_up((N + 1) // 2, 128))
    Bp = _round_up(B, Bt)
    Np = _round_up(N, Nt)
    mc = _pick_m_chunk(T, Bt, Nt)

    pad_b, pad_n = Bp - B, Np - N
    # Zero padding keeps every log argument in (0, 1]; padded rows/nodes produce
    # finite junk that is sliced off below.
    xi_p = jnp.pad(xi, ((0, 0), (0, pad_b), (0, pad_n)))
    xo_p = jnp.pad(xo, ((0, 0), (0, pad_b), (0, pad_n)))
    l1_p = jnp.pad(l1, ((0, 0), (0, 0), (0, pad_n)))
    w2_p = jnp.pad(w2, ((0, 0), (0, pad_n)))

    # VMEM: double-buffered blocks + headroom; keep tight for v7x's 64 MiB/TC.
    blk_bytes = 4 * (2 * T * Bt * Nt + T * T * Nt + T * Nt + Bt * Nt)
    vmem_limit = int(min(32 << 20, max(16 << 20, 2 * blk_bytes + (8 << 20))))

    kernel = functools.partial(_until_kernel, group=_pick_group(T), m_chunk=mc)
    out_p = pl.pallas_call(
        kernel,
        out_shape=jax.ShapeDtypeStruct((Bp, Np), x.dtype),
        grid_spec=pltpu.PrefetchScalarGridSpec(
            num_scalar_prefetch=0,
            grid=(Bp // Bt, Np // Nt),
            in_specs=[
                pl.BlockSpec((T, Bt, Nt), lambda b, n: (0, b, n)),   # xi (m-leading)
                pl.BlockSpec((T, Bt, Nt), lambda b, n: (0, b, n)),   # xo (t-leading)
                pl.BlockSpec((T, T, Nt), lambda b, n: (0, 0, n)),    # L1 table
                pl.BlockSpec((T, Nt), lambda b, n: (0, n)),          # W2 table
            ],
            out_specs=pl.BlockSpec((Bt, Nt), lambda b, n: (b, n)),
        ),
        compiler_params=pltpu.CompilerParams(
            dimension_semantics=("parallel", "parallel"),
            vmem_limit_bytes=vmem_limit,
        ),
    )(xi_p, xo_p, l1_p, w2_p)

    return out_p[:B, :N]


def until_forward_ref(x, bound1, bound2, *, bin1, bin_t):
    """Pure-JAX literal translation of UntilLayer.forward (loop form)."""
    B, D = x.shape
    Q, T = bin1, bin_t
    l = jnp.arange(T, dtype=jnp.float32)
    outs = []
    for i in range(0, D, Q * T):
        x_patch = x[:, i:i + Q * T]
        for j in range(Q):
            x_input = x_patch[:, j::Q]                       # (B, T)
            num = 0
            for k in range(Q):
                if j == k:
                    continue
                widx = i * (Q - 1) // T + j * (Q - 1) + num
                num += 1
                x_other = x_patch[:, k::Q]                   # (B, T)
                b1, b2 = bound1[widx], bound2[widx]
                w_end = 0.5 * (jnp.abs(b1 - b2) + jnp.abs(b1 + b2))
                w_start = w_end - jnp.abs(b1 - b2)
                layer2 = []
                for m in range(T):
                    wl1 = jax.nn.sigmoid((l - w_start) * (m - EPSILON2 - l))   # (T,)
                    X = 1.0 - (1.0 - x_other) * wl1[None, :]                   # (B, T)
                    layer2.append(-1.0 / (-1.0 + jnp.sum(jnp.log(X), axis=1)))
                layer2 = jnp.stack(layer2, axis=1)           # (B, T)
                u = x_input * layer2
                w = jax.nn.sigmoid((l - w_start) * (w_end - l))                # (T,)
                X2 = 1.0 - u * w[None, :]
                outs.append(1.0 - (-1.0 / (-1.0 + jnp.sum(jnp.log(X2), axis=1))))
    return jnp.stack(outs, axis=1)


if __name__ == "__main__":
    key = jax.random.PRNGKey(0)
    kx, k1, k2 = jax.random.split(key, 3)

    bin1, bin_t = 4, 8                                # Q series per patch, T time bins
    patches = 3
    batch = 8
    input_dim = patches * bin1 * bin_t                # 96
    output_dim = input_dim * (bin1 - 1) // bin_t      # 36

    # probability-like inputs; bounds follow the module's (bin_t-1)*rand init
    x = jax.random.uniform(kx, (batch, input_dim), dtype=jnp.float32)
    bound1 = (bin_t - 1) * jax.random.uniform(k1, (output_dim,), dtype=jnp.float32)
    bound2 = (bin_t - 1) * jax.random.uniform(k2, (output_dim,), dtype=jnp.float32)

    out = until_forward(x, bound1, bound2, bin1=bin1, bin_t=bin_t)
    out = jax.block_until_ready(out)

    ref = until_forward_ref(x, bound1, bound2, bin1=bin1, bin_t=bin_t)
    assert out.shape == (batch, output_dim), out.shape
    assert bool(jnp.all(jnp.isfinite(out))), "non-finite output"
    assert jnp.allclose(out, ref, atol=2e-5, rtol=2e-5), (
        "mismatch vs reference, max abs diff = %g" % float(jnp.max(jnp.abs(out - ref))))

    print("KERNEL_OK")
</pallas_src>

<mosaic_0001>
module attributes {stable_mosaic.version = 11 : i64} {
  func.func @_until_kernel(%arg0: i32, %arg1: i32, %arg2: memref<8x8x128xf32, #tpu.memory_space<vmem>>, %arg3: memref<8x8x128xf32, #tpu.memory_space<vmem>>, %arg4: memref<8x8x128xf32, #tpu.memory_space<vmem>>, %arg5: memref<8x128xf32, #tpu.memory_space<vmem>>, %arg6: memref<8x128xf32, #tpu.memory_space<vmem>>) attributes {dimension_semantics = [#tpu.dimension_semantics<parallel>, #tpu.dimension_semantics<parallel>], iteration_bounds = array<i64: 1, 1>, scalar_prefetch = 0 : i64, scratch_operands = 0 : i64, tpu.core_type = #tpu.core_type<tc>, window_params = [{transform_indices = @transform_0, window_bounds = array<i64: 8, 8, 128>}, {transform_indices = @transform_1, window_bounds = array<i64: 8, 8, 128>}, {transform_indices = @transform_2, window_bounds = array<i64: 8, 8, 128>}, {transform_indices = @transform_3, window_bounds = array<i64: 8, 128>}, {transform_indices = @transform_4, window_bounds = array<i64: 8, 128>}]} {
    %c0 = arith.constant 0 : index
    %c0_0 = arith.constant 0 : index
    %c0_1 = arith.constant 0 : index
    %0 = vector.load %arg3[%c0, %c0_0, %c0_1] : memref<8x8x128xf32, #tpu.memory_space<vmem>>, vector<1x8x128xf32>
    %1 = vector.shape_cast %0 : vector<1x8x128xf32> to vector<8x128xf32>
    %cst = arith.constant 1.000000e+00 : f32
    %2 = vector.broadcast %cst : f32 to vector<8x128xf32>
    %3 = arith.subf %2, %1 : vector<8x128xf32>
    %c0_2 = arith.constant 0 : index
    %c0_3 = arith.constant 0 : index
    %c0_4 = arith.constant 0 : index
    %4 = vector.load %arg4[%c0_2, %c0_3, %c0_4] : memref<8x8x128xf32, #tpu.memory_space<vmem>>, vector<1x8x128xf32>
    %5 = vector.shape_cast %4 : vector<1x8x128xf32> to vector<8x128xf32>
    %6 = vector.shape_cast %3 : vector<8x128xf32> to vector<1x8x128xf32>
    %7 = vector.shape_cast %5 : vector<8x128xf32> to vector<8x1x128xf32>
    %8 = vector.broadcast %6 : vector<1x8x128xf32> to vector<8x8x128xf32>
    %9 = vector.broadcast %7 : vector<8x1x128xf32> to vector<8x8x128xf32>
    %10 = arith.mulf %8, %9 : vector<8x8x128xf32>
    %cst_5 = arith.constant 1.000000e+00 : f32
    %11 = vector.broadcast %cst_5 : f32 to vector<8x8x128xf32>
    %12 = arith.subf %11, %10 : vector<8x8x128xf32>
    %c1 = arith.constant 1 : index
    %c0_6 = arith.constant 0 : index
    %c0_7 = arith.constant 0 : index
    %13 = vector.load %arg3[%c1, %c0_6, %c0_7] : memref<8x8x128xf32, #tpu.memory_space<vmem>>, vector<1x8x128xf32>
    %14 = vector.shape_cast %13 : vector<1x8x128xf32> to vector<8x128xf32>
    %cst_8 = arith.constant 1.000000e+00 : f32
    %15 = vector.broadcast %cst_8 : f32 to vector<8x128xf32>
    %16 = arith.subf %15, %14 : vector<8x128xf32>
    %c1_9 = arith.constant 1 : index
    %c0_10 = arith.constant 0 : index
    %c0_11 = arith.constant 0 : index
    %17 = vector.load %arg4[%c1_9, %c0_10, %c0_11] : memref<8x8x128xf32, #tpu.memory_space<vmem>>, vector<1x8x128xf32>
    %18 = vector.shape_cast %17 : vector<1x8x128xf32> to vector<8x128xf32>
    %19 = vector.shape_cast %16 : vector<8x128xf32> to vector<1x8x128xf32>
    %20 = vector.shape_cast %18 : vector<8x128xf32> to vector<8x1x128xf32>
    %21 = vector.broadcast %19 : vector<1x8x128xf32> to vector<8x8x128xf32>
    %22 = vector.broadcast %20 : vector<8x1x128xf32> to vector<8x8x128xf32>
    %23 = arith.mulf %21, %22 : vector<8x8x128xf32>
    %cst_12 = arith.constant 1.000000e+00 : f32
    %24 = vector.broadcast %cst_12 : f32 to vector<8x8x128xf32>
    %25 = arith.subf %24, %23 : vector<8x8x128xf32>
    %26 = arith.mulf %12, %25 : vector<8x8x128xf32>
    %c2 = arith.constant 2 : index
    %c0_13 = arith.constant 0 : index
    %c0_14 = arith.constant 0 : index
    %27 = vector.load %arg3[%c2, %c0_13, %c0_14] : memref<8x8x128xf32, #tpu.memory_space<vmem>>, vector<1x8x128xf32>
    %28 = vector.shape_cast %27 : vector<1x8x128xf32> to vector<8x128xf32>
    %cst_15 = arith.constant 1.000000e+00 : f32
    %29 = vector.broadcast %cst_15 : f32 to vector<8x128xf32>
    %30 = arith.subf %29, %28 : vector<8x128xf32>
    %c2_16 = arith.constant 2 : index
    %c0_17 = arith.constant 0 : index
    %c0_18 = arith.constant 0 : index
    %31 = vector.load %arg4[%c2_16, %c0_17, %c0_18] : memref<8x8x128xf32, #tpu.memory_space<vmem>>, vector<1x8x128xf32>
    %32 = vector.shape_cast %31 : vector<1x8x128xf32> to vector<8x128xf32>
    %33 = vector.shape_cast %30 : vector<8x128xf32> to vector<1x8x128xf32>
    %34 = vector.shape_cast %32 : vector<8x128xf32> to vector<8x1x128xf32>
    %35 = vector.broadcast %33 : vector<1x8x128xf32> to vector<8x8x128xf32>
    %36 = vector.broadcast %34 : vector<8x1x128xf32> to vector<8x8x128xf32>
    %37 = arith.mulf %35, %36 : vector<8x8x128xf32>
    %cst_19 = arith.constant 1.000000e+00 : f32
    %38 = vector.broadcast %cst_19 : f32 to vector<8x8x128xf32>
    %39 = arith.subf %38, %37 : vector<8x8x128xf32>
    %c3 = arith.constant 3 : index
    %c0_20 = arith.constant 0 : index
    %c0_21 = arith.constant 0 : index
    %40 = vector.load %arg3[%c3, %c0_20, %c0_21] : memref<8x8x128xf32, #tpu.memory_space<vmem>>, vector<1x8x128xf32>
    %41 = vector.shape_cast %40 : vector<1x8x128xf32> to vector<8x128xf32>
    %cst_22 = arith.constant 1.000000e+00 : f32
    %42 = vector.broadcast %cst_22 : f32 to vector<8x128xf32>
    %43 = arith.subf %42, %41 : vector<8x128xf32>
    %c3_23 = arith.constant 3 : index
    %c0_24 = arith.constant 0 : index
    %c0_25 = arith.constant 0 : index
    %44 = vector.load %arg4[%c3_23, %c0_24, %c0_25] : memref<8x8x128xf32, #tpu.memory_space<vmem>>, vector<1x8x128xf32>
    %45 = vector.shape_cast %44 : vector<1x8x128xf32> to vector<8x128xf32>
    %46 = vector.shape_cast %43 : vector<8x128xf32> to vector<1x8x128xf32>
    %47 = vector.shape_cast %45 : vector<8x128xf32> to vector<8x1x128xf32>
    %48 = vector.broadcast %46 : vector<1x8x128xf32> to vector<8x8x128xf32>
    %49 = vector.broadcast %47 : vector<8x1x128xf32> to vector<8x8x128xf32>
    %50 = arith.mulf %48, %49 : vector<8x8x128xf32>
    %cst_26 = arith.constant 1.000000e+00 : f32
    %51 = vector.broadcast %cst_26 : f32 to vector<8x8x128xf32>
    %52 = arith.subf %51, %50 : vector<8x8x128xf32>
    %53 = arith.mulf %39, %52 : vector<8x8x128xf32>
    %54 = arith.mulf %26, %53 : vector<8x8x128xf32>
    %c4 = arith.constant 4 : index
    %c0_27 = arith.constant 0 : index
    %c0_28 = arith.constant 0 : index
    %55 = vector.load %arg3[%c4, %c0_27, %c0_28] : memref<8x8x128xf32, #tpu.memory_space<vmem>>, vector<1x8x128xf32>
    %56 = vector.shape_cast %55 : vector<1x8x128xf32> to vector<8x128xf32>
    %cst_29 = arith.constant 1.000000e+00 : f32
    %57 = vector.broadcast %cst_29 : f32 to vector<8x128xf32>
    %58 = arith.subf %57, %56 : vector<8x128xf32>
    %c4_30 = arith.constant 4 : index
    %c0_31 = arith.constant 0 : index
    %c0_32 = arith.constant 0 : index
    %59 = vector.load %arg4[%c4_30, %c0_31, %c0_32] : memref<8x8x128xf32, #tpu.memory_space<vmem>>, vector<1x8x128xf32>
    %60 = vector.shape_cast %59 : vector<1x8x128xf32> to vector<8x128xf32>
    %61 = vector.shape_cast %58 : vector<8x128xf32> to vector<1x8x128xf32>
    %62 = vector.shape_cast %60 : vector<8x128xf32> to vector<8x1x128xf32>
    %63 = vector.broadcast %61 : vector<1x8x128xf32> to vector<8x8x128xf32>
    %64 = vector.broadcast %62 : vector<8x1x128xf32> to vector<8x8x128xf32>
    %65 = arith.mulf %63, %64 : vector<8x8x128xf32>
    %cst_33 = arith.constant 1.000000e+00 : f32
    %66 = vector.broadcast %cst_33 : f32 to vector<8x8x128xf32>
    %67 = arith.subf %66, %65 : vector<8x8x128xf32>
    %c5 = arith.constant 5 : index
    %c0_34 = arith.constant 0 : index
    %c0_35 = arith.constant 0 : index
    %68 = vector.load %arg3[%c5, %c0_34, %c0_35] : memref<8x8x128xf32, #tpu.memory_space<vmem>>, vector<1x8x128xf32>
    %69 = vector.shape_cast %68 : vector<1x8x128xf32> to vector<8x128xf32>
    %cst_36 = arith.constant 1.000000e+00 : f32
    %70 = vector.broadcast %cst_36 : f32 to vector<8x128xf32>
    %71 = arith.subf %70, %69 : vector<8x128xf32>
    %c5_37 = arith.constant 5 : index
    %c0_38 = arith.constant 0 : index
    %c0_39 = arith.constant 0 : index
    %72 = vector.load %arg4[%c5_37, %c0_38, %c0_39] : memref<8x8x128xf32, #tpu.memory_space<vmem>>, vector<1x8x128xf32>
    %73 = vector.shape_cast %72 : vector<1x8x128xf32> to vector<8x128xf32>
    %74 = vector.shape_cast %71 : vector<8x128xf32> to vector<1x8x128xf32>
    %75 = vector.shape_cast %73 : vector<8x128xf32> to vector<8x1x128xf32>
    %76 = vector.broadcast %74 : vector<1x8x128xf32> to vector<8x8x128xf32>
    %77 = vector.broadcast %75 : vector<8x1x128xf32> to vector<8x8x128xf32>
    %78 = arith.mulf %76, %77 : vector<8x8x128xf32>
    %cst_40 = arith.constant 1.000000e+00 : f32
    %79 = vector.broadcast %cst_40 : f32 to vector<8x8x128xf32>
    %80 = arith.subf %79, %78 : vector<8x8x128xf32>
    %81 = arith.mulf %67, %80 : vector<8x8x128xf32>
    %82 = arith.mulf %54, %81 : vector<8x8x128xf32>
    %c6 = arith.constant 6 : index
    %c0_41 = arith.constant 0 : index
    %c0_42 = arith.constant 0 : index
    %83 = vector.load %arg3[%c6, %c0_41, %c0_42] : memref<8x8x128xf32, #tpu.memory_space<vmem>>, vector<1x8x128xf32>
    %84 = vector.shape_cast %83 : vector<1x8x128xf32> to vector<8x128xf32>
    %cst_43 = arith.constant 1.000000e+00 : f32
    %85 = vector.broadcast %cst_43 : f32 to vector<8x128xf32>
    %86 = arith.subf %85, %84 : vector<8x128xf32>
    %c6_44 = arith.constant 6 : index
    %c0_45 = arith.constant 0 : index
    %c0_46 = arith.constant 0 : index
    %87 = vector.load %arg4[%c6_44, %c0_45, %c0_46] : memref<8x8x128xf32, #tpu.memory_space<vmem>>, vector<1x8x128xf32>
    %88 = vector.shape_cast %87 : vector<1x8x128xf32> to vector<8x128xf32>
    %89 = vector.shape_cast %86 : vector<8x128xf32> to vector<1x8x128xf32>
    %90 = vector.shape_cast %88 : vector<8x128xf32> to vector<8x1x128xf32>
    %91 = vector.broadcast %89 : vector<1x8x128xf32> to vector<8x8x128xf32>
    %92 = vector.broadcast %90 : vector<8x1x128xf32> to vector<8x8x128xf32>
    %93 = arith.mulf %91, %92 : vector<8x8x128xf32>
    %cst_47 = arith.constant 1.000000e+00 : f32
    %94 = vector.broadcast %cst_47 : f32 to vector<8x8x128xf32>
    %95 = arith.subf %94, %93 : vector<8x8x128xf32>
    %c7 = arith.constant 7 : index
    %c0_48 = arith.constant 0 : index
    %c0_49 = arith.constant 0 : index
    %96 = vector.load %arg3[%c7, %c0_48, %c0_49] : memref<8x8x128xf32, #tpu.memory_space<vmem>>, vector<1x8x128xf32>
    %97 = vector.shape_cast %96 : vector<1x8x128xf32> to vector<8x128xf32>
    %cst_50 = arith.constant 1.000000e+00 : f32
    %98 = vector.broadcast %cst_50 : f32 to vector<8x128xf32>
    %99 = arith.subf %98, %97 : vector<8x128xf32>
    %c7_51 = arith.constant 7 : index
    %c0_52 = arith.constant 0 : index
    %c0_53 = arith.constant 0 : index
    %100 = vector.load %arg4[%c7_51, %c0_52, %c0_53] : memref<8x8x128xf32, #tpu.memory_space<vmem>>, vector<1x8x128xf32>
    %101 = vector.shape_cast %100 : vector<1x8x128xf32> to vector<8x128xf32>
    %102 = vector.shape_cast %99 : vector<8x128xf32> to vector<1x8x128xf32>
    %103 = vector.shape_cast %101 : vector<8x128xf32> to vector<8x1x128xf32>
    %104 = vector.broadcast %102 : vector<1x8x128xf32> to vector<8x8x128xf32>
    %105 = vector.broadcast %103 : vector<8x1x128xf32> to vector<8x8x128xf32>
    %106 = arith.mulf %104, %105 : vector<8x8x128xf32>
    %cst_54 = arith.constant 1.000000e+00 : f32
    %107 = vector.broadcast %cst_54 : f32 to vector<8x8x128xf32>
    %108 = arith.subf %107, %106 : vector<8x8x128xf32>
    %109 = arith.mulf %95, %108 : vector<8x8x128xf32>
    %110 = arith.mulf %82, %109 : vector<8x8x128xf32>
    %111 = math.log %110 : vector<8x8x128xf32>
    %cst_55 = arith.constant 1.000000e+00 : f32
    %112 = vector.broadcast %cst_55 : f32 to vector<8x8x128xf32>
    %113 = arith.subf %111, %112 : vector<8x8x128xf32>
    %114 = tpu.reciprocal %113 : vector<8x8x128xf32> -> vector<8x8x128xf32>
    %cst_56 = arith.constant 0.000000e+00 : f32
    %115 = vector.broadcast %cst_56 : f32 to vector<8x8x128xf32>
    %116 = arith.subf %115, %114 : vector<8x8x128xf32>
    %c0_57 = arith.constant 0 : index
    %c0_58 = arith.constant 0 : index
    %c0_59 = arith.constant 0 : index
    %117 = vector.load %arg2[%c0_57, %c0_58, %c0_59] : memref<8x8x128xf32, #tpu.memory_space<vmem>>, vector<8x8x128xf32>
    %118 = arith.mulf %117, %116 : vector<8x8x128xf32>
    %c0_60 = arith.constant 0 : index
    %c0_61 = arith.constant 0 : index
    %119 = vector.load %arg5[%c0_60, %c0_61] : memref<8x128xf32, #tpu.memory_space<vmem>>, vector<8x128xf32>
    %120 = vector.shape_cast %119 : vector<8x128xf32> to vector<8x1x128xf32>
    %121 = vector.broadcast %120 : vector<8x1x128xf32> to vector<8x8x128xf32>
    %122 = arith.mulf %118, %121 : vector<8x8x128xf32>
    %cst_62 = arith.constant 1.000000e+00 : f32
    %123 = vector.broadcast %cst_62 : f32 to vector<8x8x128xf32>
    %124 = arith.subf %123, %122 : vector<8x8x128xf32>
    %125 = vector.extract_strided_slice %124 {offsets = [0, 0, 0], sizes = [1, 8, 128], strides = [1, 1, 1]} : vector<8x8x128xf32> to vector<1x8x128xf32>
    %126 = vector.shape_cast %125 : vector<1x8x128xf32> to vector<8x128xf32>
    %127 = vector.extract_strided_slice %124 {offsets = [1, 0, 0], sizes = [1, 8, 128], strides = [1, 1, 1]} : vector<8x8x128xf32> to vector<1x8x128xf32>
    %128 = vector.shape_cast %127 : vector<1x8x128xf32> to vector<8x128xf32>
    %129 = arith.mulf %126, %128 : vector<8x128xf32>
    %130 = vector.extract_strided_slice %124 {offsets = [2, 0, 0], sizes = [1, 8, 128], strides = [1, 1, 1]} : vector<8x8x128xf32> to vector<1x8x128xf32>
    %131 = vector.shape_cast %130 : vector<1x8x128xf32> to vector<8x128xf32>
    %132 = arith.mulf %129, %131 : vector<8x128xf32>
    %133 = vector.extract_strided_slice %124 {offsets = [3, 0, 0], sizes = [1, 8, 128], strides = [1, 1, 1]} : vector<8x8x128xf32> to vector<1x8x128xf32>
    %134 = vector.shape_cast %133 : vector<1x8x128xf32> to vector<8x128xf32>
    %135 = arith.mulf %132, %134 : vector<8x128xf32>
    %136 = vector.extract_strided_slice %124 {offsets = [4, 0, 0], sizes = [1, 8, 128], strides = [1, 1, 1]} : vector<8x8x128xf32> to vector<1x8x128xf32>
    %137 = vector.shape_cast %136 : vector<1x8x128xf32> to vector<8x128xf32>
    %138 = arith.mulf %135, %137 : vector<8x128xf32>
    %139 = vector.extract_strided_slice %124 {offsets = [5, 0, 0], sizes = [1, 8, 128], strides = [1, 1, 1]} : vector<8x8x128xf32> to vector<1x8x128xf32>
    %140 = vector.shape_cast %139 : vector<1x8x128xf32> to vector<8x128xf32>
    %141 = arith.mulf %138, %140 : vector<8x128xf32>
    %142 = vector.extract_strided_slice %124 {offsets = [6, 0, 0], sizes = [1, 8, 128], strides = [1, 1, 1]} : vector<8x8x128xf32> to vector<1x8x128xf32>
    %143 = vector.shape_cast %142 : vector<1x8x128xf32> to vector<8x128xf32>
    %144 = arith.mulf %141, %143 : vector<8x128xf32>
    %145 = vector.extract_strided_slice %124 {offsets = [7, 0, 0], sizes = [1, 8, 128], strides = [1, 1, 1]} : vector<8x8x128xf32> to vector<1x8x128xf32>
    %146 = vector.shape_cast %145 : vector<1x8x128xf32> to vector<8x128xf32>
    %147 = arith.mulf %144, %146 : vector<8x128xf32>
    %148 = math.log %147 : vector<8x128xf32>
    %cst_63 = arith.constant 1.000000e+00 : f32
    %149 = vector.broadcast %cst_63 : f32 to vector<8x128xf32>
    %150 = arith.subf %148, %149 : vector<8x128xf32>
    %151 = tpu.reciprocal %150 : vector<8x128xf32> -> vector<8x128xf32>
    %cst_64 = arith.constant 1.000000e+00 : f32
    %152 = vector.broadcast %cst_64 : f32 to vector<8x128xf32>
    %153 = arith.addf %152, %151 : vector<8x128xf32>
    %c0_65 = arith.constant 0 : index
    %c0_66 = arith.constant 0 : index
    %154 = vector.load %arg6[%c0_65, %c0_66] : memref<8x128xf32, #tpu.memory_space<vmem>>, vector<8x128xf32>
    tpu.vector_store %arg6[%c0_65, %c0_66], %153 {strides = array<i32>} : memref<8x128xf32, #tpu.memory_space<vmem>>, vector<8x128xf32>,
    return
  }
  func.func @transform_0(%arg0: i32, %arg1: i32) -> (i32, i32, i32) {
    %c0_i32 = arith.constant 0 : i32
    %c0_i32_0 = arith.constant 0 : i32
    return %c0_i32, %arg0, %arg1 : i32, i32, i32
  }
  func.func @transform_1(%arg0: i32, %arg1: i32) -> (i32, i32, i32) {
    %c0_i32 = arith.constant 0 : i32
    %c0_i32_0 = arith.constant 0 : i32
    return %c0_i32, %arg0, %arg1 : i32, i32, i32
  }
  func.func @transform_2(%arg0: i32, %arg1: i32) -> (i32, i32, i32) {
    %c0_i32 = arith.constant 0 : i32
    %c0_i32_0 = arith.constant 0 : i32
    %c0_i32_1 = arith.constant 0 : i32
    return %c0_i32, %c0_i32_0, %arg1 : i32, i32, i32
  }
  func.func @transform_3(%arg0: i32, %arg1: i32) -> (i32, i32) {
    %c0_i32 = arith.constant 0 : i32
    %c0_i32_0 = arith.constant 0 : i32
    return %c0_i32, %arg1 : i32, i32
  }
  func.func @transform_4(%arg0: i32, %arg1: i32) -> (i32, i32) {
    %c0_i32 = arith.constant 0 : i32
    return %arg0, %arg1 : i32, i32
  }
}

</mosaic_0001>

<llo_original>
// kernel: until_forward.1
$region0: #{until_forward.1}
  #allocation0 [shape = 'u32[]', space=smem, size = 0x4, offset = 0x4, fixed_abs, tag = 'smem constant byte address 0x4 - core index']
  #allocation1 [shape = 'u32[72,128]{1,0:T(1,128)}', space=vmem, size = 0x9000, scoped, tag = 'internal scratch']
  %s0 = inlined_call_operand.vmem [shape: f32[8,8,128], index: 0, kind: input, shape index: {}]
  %s1 = inlined_call_operand.vmem [shape: f32[8,8,128], index: 1, kind: input, shape index: {}]
  %s2 = inlined_call_operand.vmem [shape: f32[8,8,128], index: 2, kind: input, shape index: {}]
  %s3 = inlined_call_operand.vmem [shape: f32[8,128], index: 3, kind: input, shape index: {}]
  %s4 = inlined_call_operand.hbm [shape: f32[8,128], index: 4, kind: output, shape index: {}]
  %s5 = sld [smem:[#allocation0]]
  $region26: #{until_forward.1} parent=0
    _
  %s7 = ssub.s32 1, %s5
  %s8 = scalar_select 0, %s7, %s5
  $region1: #{until_forward.1} parent=0
    #allocation2 [shape = 'u8[4096]{0}', space=vmem, size = 0x1000, scoped, tag = 'output window, operand 0, single buffered']
    #allocation3 [shape = 's32[1]{0}', space=sflag, size = 0x4, scoped, tag = 'scoped memory for until_forward.1']
    %9 = vsyncpa [#allocation3], 0
    // Predicated region
    $region2: #{until_forward.1} parent=1 // pred_check
      _
    $region3: #{until_forward.1} parent=1 // pred_check_branch
      %11 = sbr.rel (0) target = $region5
    $region4: #{until_forward.1} parent=1 // pred_region
      _
    $region5: #{until_forward.1} parent=1 // pred_fallthru
      _
    // Predicated region
    $region6: #{until_forward.1} parent=1 // pred_check
      _
    $region7: #{until_forward.1} parent=1 // pred_check_branch
      %13 = sbr.rel (0) target = $region9
    $region8: #{until_forward.1} parent=1 // pred_region
      _
    $region9: #{until_forward.1} parent=1 // pred_fallthru
      _
    // Predicated region
    $region10: #{until_forward.1} parent=1 // pred_check
      _
    $region11: #{until_forward.1} parent=1 // pred_check_branch
      %15 = sbr.rel (0) target = $region13
    $region12: #{until_forward.1} parent=1 // pred_region
      _
    $region13: #{until_forward.1} parent=1 // pred_fallthru
      _
    // Predicated region
    $region14: #{until_forward.1} parent=1 // pred_check
      _
    $region15: #{until_forward.1} parent=1 // pred_check_branch
      %17 = sbr.rel (0) target = $region17
    $region16: #{until_forward.1} parent=1 // pred_region
      _
    $region17: #{until_forward.1} parent=1 // pred_fallthru
      _
    %v18 = vld [vmem:[%s1] sm:$0xff]
    %v19 = vsub.f32 1.0, %v18
    %v20 = vld [vmem:[%s2] sm:$0xff]
    %v22 = vrot.slane %v20, 1
    %v23 = vrot.slane %v20, 2
    %v24 = vrot.slane %v20, 3
    %v25 = vrot.slane %v20, 4
    %v26 = vrot.slane %v20, 5
    %v27 = vrot.slane %v20, 6
    %v28 = vrot.slane %v20, 7
    %v29 = vperm.slane %v20, 0
    %v30 = vperm.slane %v22, 0
    %v31 = vperm.slane %v23, 0
    %v32 = vperm.slane %v24, 0
    %v33 = vperm.slane %v25, 0
    %v34 = vperm.slane %v26, 0
    %v35 = vperm.slane %v27, 0
    %v36 = vperm.slane %v28, 0
    %v45 = vmul.f32 %v19, %v29
    %v46 = vmul.f32 %v19, %v30
    %v47 = vmul.f32 %v19, %v31
    %v48 = vmul.f32 %v19, %v32
    %v49 = vmul.f32 %v19, %v33
    %v50 = vmul.f32 %v19, %v34
    %v51 = vmul.f32 %v19, %v35
    %v52 = vmul.f32 %v19, %v36
    %v53 = vsub.f32 1.0, %v45
    %v54 = vsub.f32 1.0, %v46
    %v55 = vsub.f32 1.0, %v47
    %v56 = vsub.f32 1.0, %v48
    %v57 = vsub.f32 1.0, %v49
    %v58 = vsub.f32 1.0, %v50
    %v59 = vsub.f32 1.0, %v51
    %v60 = vsub.f32 1.0, %v52
    %s61 = scalar_lea.vmem %s1, 8
    %v62 = vld [vmem:[%s61] sm:$0xff]
    %v63 = vsub.f32 1.0, %v62
    %s64 = scalar_lea.vmem %s2, 8
    %v65 = vld [vmem:[%s64] sm:$0xff]
    %v67 = vrot.slane %v65, 1
    %v68 = vrot.slane %v65, 2
    %v69 = vrot.slane %v65, 3
    %v70 = vrot.slane %v65, 4
    %v71 = vrot.slane %v65, 5
    %v72 = vrot.slane %v65, 6
    %v73 = vrot.slane %v65, 7
    %v74 = vperm.slane %v65, 0
    %v75 = vperm.slane %v67, 0
    %v76 = vperm.slane %v68, 0
    %v77 = vperm.slane %v69, 0
    %v78 = vperm.slane %v70, 0
    %v79 = vperm.slane %v71, 0
    %v80 = vperm.slane %v72, 0
    %v81 = vperm.slane %v73, 0
    %v90 = vmul.f32 %v63, %v74
    %v91 = vmul.f32 %v63, %v75
    %v92 = vmul.f32 %v63, %v76
    %v93 = vmul.f32 %v63, %v77
    %v94 = vmul.f32 %v63, %v78
    %v95 = vmul.f32 %v63, %v79
    %v96 = vmul.f32 %v63, %v80
    %v97 = vmul.f32 %v63, %v81
    %v98 = vsub.f32 1.0, %v90
    %v99 = vsub.f32 1.0, %v91
    %v100 = vsub.f32 1.0, %v92
    %v101 = vsub.f32 1.0, %v93
    %v102 = vsub.f32 1.0, %v94
    %v103 = vsub.f32 1.0, %v95
    %v104 = vsub.f32 1.0, %v96
    %v105 = vsub.f32 1.0, %v97
    %v106 = vmul.f32 %v53, %v98
    %v107 = vmul.f32 %v54, %v99
    %v108 = vmul.f32 %v55, %v100
    %v109 = vmul.f32 %v56, %v101
    %v110 = vmul.f32 %v57, %v102
    %v111 = vmul.f32 %v58, %v103
    %v112 = vmul.f32 %v59, %v104
    %v113 = vmul.f32 %v60, %v105
    %s114 = scalar_lea.vmem %s1, 16
    %v115 = vld [vmem:[%s114] sm:$0xff]
    %v116 = vsub.f32 1.0, %v115
    %s117 = scalar_lea.vmem %s2, 16
    %v118 = vld [vmem:[%s117] sm:$0xff]
    %v120 = vrot.slane %v118, 1
    %v121 = vrot.slane %v118, 2
    %v122 = vrot.slane %v118, 3
    %v123 = vrot.slane %v118, 4
    %v124 = vrot.slane %v118, 5
    %v125 = vrot.slane %v118, 6
    %v126 = vrot.slane %v118, 7
    %v127 = vperm.slane %v118, 0
    %v128 = vperm.slane %v120, 0
    %v129 = vperm.slane %v121, 0
    %v130 = vperm.slane %v122, 0
    %v131 = vperm.slane %v123, 0
    %v132 = vperm.slane %v124, 0
    %v133 = vperm.slane %v125, 0
    %v134 = vperm.slane %v126, 0
    %v143 = vmul.f32 %v116, %v127
    %v144 = vmul.f32 %v116, %v128
    %v145 = vmul.f32 %v116, %v129
    %v146 = vmul.f32 %v116, %v130
    %v147 = vmul.f32 %v116, %v131
    %v148 = vmul.f32 %v116, %v132
    %v149 = vmul.f32 %v116, %v133
    %v150 = vmul.f32 %v116, %v134
    %v151 = vsub.f32 1.0, %v143
    %v152 = vsub.f32 1.0, %v144
    %v153 = vsub.f32 1.0, %v145
    %v154 = vsub.f32 1.0, %v146
    %v155 = vsub.f32 1.0, %v147
    %v156 = vsub.f32 1.0, %v148
    %v157 = vsub.f32 1.0, %v149
    %v158 = vsub.f32 1.0, %v150
    %s159 = scalar_lea.vmem %s1, 24
    %v160 = vld [vmem:[%s159] sm:$0xff]
    %v161 = vsub.f32 1.0, %v160
    %s162 = scalar_lea.vmem %s2, 24
    %v163 = vld [vmem:[%s162] sm:$0xff]
    %v165 = vrot.slane %v163, 1
    %v166 = vrot.slane %v163, 2
    %v167 = vrot.slane %v163, 3
    %v168 = vrot.slane %v163, 4
    %v169 = vrot.slane %v163, 5
    %v170 = vrot.slane %v163, 6
    %v171 = vrot.slane %v163, 7
    %v172 = vperm.slane %v163, 0
    %v173 = vperm.slane %v165, 0
    %v174 = vperm.slane %v166, 0
    %v175 = vperm.slane %v167, 0
    %v176 = vperm.slane %v168, 0
    %v177 = vperm.slane %v169, 0
    %v178 = vperm.slane %v170, 0
    %v179 = vperm.slane %v171, 0
    %v188 = vmul.f32 %v161, %v172
    %v189 = vmul.f32 %v161, %v173
    %v190 = vmul.f32 %v161, %v174
    %v191 = vmul.f32 %v161, %v175
    %v192 = vmul.f32 %v161, %v176
    %v193 = vmul.f32 %v161, %v177
    %v194 = vmul.f32 %v161, %v178
    %v195 = vmul.f32 %v161, %v179
    %v196 = vsub.f32 1.0, %v188
    %v197 = vsub.f32 1.0, %v189
    %v198 = vsub.f32 1.0, %v190
    %v199 = vsub.f32 1.0, %v191
    %v200 = vsub.f32 1.0, %v192
    %v201 = vsub.f32 1.0, %v193
    %v202 = vsub.f32 1.0, %v194
    %v203 = vsub.f32 1.0, %v195
    %v204 = vmul.f32 %v151, %v196
    %v205 = vmul.f32 %v152, %v197
    %v206 = vmul.f32 %v153, %v198
    %v207 = vmul.f32 %v154, %v199
    %v208 = vmul.f32 %v155, %v200
    %v209 = vmul.f32 %v156, %v201
    %v210 = vmul.f32 %v157, %v202
    %v211 = vmul.f32 %v158, %v203
    %v212 = vmul.f32 %v106, %v204
    %v213 = vmul.f32 %v107, %v205
    %v214 = vmul.f32 %v108, %v206
    %v215 = vmul.f32 %v109, %v207
    %v216 = vmul.f32 %v110, %v208
    %v217 = vmul.f32 %v111, %v209
    %v218 = vmul.f32 %v112, %v210
    %v219 = vmul.f32 %v113, %v211
    %s220 = scalar_lea.vmem %s1, 32
    %v221 = vld [vmem:[%s220] sm:$0xff]
    %v222 = vsub.f32 1.0, %v221
    %s223 = scalar_lea.vmem %s2, 32
    %v224 = vld [vmem:[%s223] sm:$0xff]
    %v226 = vrot.slane %v224, 1
    %v227 = vrot.slane %v224, 2
    %v228 = vrot.slane %v224, 3
    %v229 = vrot.slane %v224, 4
    %v230 = vrot.slane %v224, 5
    %v231 = vrot.slane %v224, 6
    %v232 = vrot.slane %v224, 7
    %v233 = vperm.slane %v224, 0
    %v234 = vperm.slane %v226, 0
    %v235 = vperm.slane %v227, 0
    %v236 = vperm.slane %v228, 0
    %v237 = vperm.slane %v229, 0
    %v238 = vperm.slane %v230, 0
    %v239 = vperm.slane %v231, 0
    %v240 = vperm.slane %v232, 0
    %v249 = vmul.f32 %v222, %v233
    %v250 = vmul.f32 %v222, %v234
    %v251 = vmul.f32 %v222, %v235
    %v252 = vmul.f32 %v222, %v236
    %v253 = vmul.f32 %v222, %v237
    %v254 = vmul.f32 %v222, %v238
    %v255 = vmul.f32 %v222, %v239
    %v256 = vmul.f32 %v222, %v240
    %v257 = vsub.f32 1.0, %v249
    %v258 = vsub.f32 1.0, %v250
    %v259 = vsub.f32 1.0, %v251
    %v260 = vsub.f32 1.0, %v252
    %v261 = vsub.f32 1.0, %v253
    %v262 = vsub.f32 1.0, %v254
    %v263 = vsub.f32 1.0, %v255
    %v264 = vsub.f32 1.0, %v256
    %s265 = scalar_lea.vmem %s1, 40
    %v266 = vld [vmem:[%s265] sm:$0xff]
    %v267 = vsub.f32 1.0, %v266
    %s268 = scalar_lea.vmem %s2, 40
    %v269 = vld [vmem:[%s268] sm:$0xff]
    %v271 = vrot.slane %v269, 1
    %v272 = vrot.slane %v269, 2
    %v273 = vrot.slane %v269, 3
    %v274 = vrot.slane %v269, 4
    %v275 = vrot.slane %v269, 5
    %v276 = vrot.slane %v269, 6
    %v277 = vrot.slane %v269, 7
    %v278 = vperm.slane %v269, 0
    %v279 = vperm.slane %v271, 0
    %v280 = vperm.slane %v272, 0
    %v281 = vperm.slane %v273, 0
    %v282 = vperm.slane %v274, 0
    %v283 = vperm.slane %v275, 0
    %v284 = vperm.slane %v276, 0
    %v285 = vperm.slane %v277, 0
    %v294 = vmul.f32 %v267, %v278
    %v295 = vmul.f32 %v267, %v279
    %v296 = vmul.f32 %v267, %v280
    %v297 = vmul.f32 %v267, %v281
    %v298 = vmul.f32 %v267, %v282
    %v299 = vmul.f32 %v267, %v283
    %v300 = vmul.f32 %v267, %v284
    %v301 = vmul.f32 %v267, %v285
    %v302 = vsub.f32 1.0, %v294
    %v303 = vsub.f32 1.0, %v295
    %v304 = vsub.f32 1.0, %v296
    %v305 = vsub.f32 1.0, %v297
    %v306 = vsub.f32 1.0, %v298
    %v307 = vsub.f32 1.0, %v299
    %v308 = vsub.f32 1.0, %v300
    %v309 = vsub.f32 1.0, %v301
    %v310 = vmul.f32 %v257, %v302
    %v311 = vmul.f32 %v258, %v303
    %v312 = vmul.f32 %v259, %v304
    %v313 = vmul.f32 %v260, %v305
    %v314 = vmul.f32 %v261, %v306
    %v315 = vmul.f32 %v262, %v307
    %v316 = vmul.f32 %v263, %v308
    %v317 = vmul.f32 %v264, %v309
    %v318 = vmul.f32 %v212, %v310
    %v319 = vmul.f32 %v213, %v311
    %v320 = vmul.f32 %v214, %v312
    %v321 = vmul.f32 %v215, %v313
    %v322 = vmul.f32 %v216, %v314
    %v323 = vmul.f32 %v217, %v315
    %v324 = vmul.f32 %v218, %v316
    %v325 = vmul.f32 %v219, %v317
    %s326 = scalar_lea.vmem %s1, 48
    %v327 = vld [vmem:[%s326] sm:$0xff]
    %v328 = vsub.f32 1.0, %v327
    %s329 = scalar_lea.vmem %s2, 48
    %v330 = vld [vmem:[%s329] sm:$0xff]
    %v332 = vrot.slane %v330, 1
    %v333 = vrot.slane %v330, 2
    %v334 = vrot.slane %v330, 3
    %v335 = vrot.slane %v330, 4
    %v336 = vrot.slane %v330, 5
    %v337 = vrot.slane %v330, 6
    %v338 = vrot.slane %v330, 7
    %v339 = vperm.slane %v330, 0
    %v340 = vperm.slane %v332, 0
    %v341 = vperm.slane %v333, 0
    %v342 = vperm.slane %v334, 0
    %v343 = vperm.slane %v335, 0
    %v344 = vperm.slane %v336, 0
    %v345 = vperm.slane %v337, 0
    %v346 = vperm.slane %v338, 0
    %v355 = vmul.f32 %v328, %v339
    %v356 = vmul.f32 %v328, %v340
    %v357 = vmul.f32 %v328, %v341
    %v358 = vmul.f32 %v328, %v342
    %v359 = vmul.f32 %v328, %v343
    %v360 = vmul.f32 %v328, %v344
    %v361 = vmul.f32 %v328, %v345
    %v362 = vmul.f32 %v328, %v346
    %v363 = vsub.f32 1.0, %v355
    %v364 = vsub.f32 1.0, %v356
    %v365 = vsub.f32 1.0, %v357
    %v366 = vsub.f32 1.0, %v358
    %v367 = vsub.f32 1.0, %v359
    %v368 = vsub.f32 1.0, %v360
    %v369 = vsub.f32 1.0, %v361
    %v370 = vsub.f32 1.0, %v362
    %s371 = scalar_lea.vmem %s1, 56
    %v372 = vld [vmem:[%s371] sm:$0xff]
    %v373 = vsub.f32 1.0, %v372
    %s374 = scalar_lea.vmem %s2, 56
    %v375 = vld [vmem:[%s374] sm:$0xff]
    %v377 = vrot.slane %v375, 1
    %v378 = vrot.slane %v375, 2
    %v379 = vrot.slane %v375, 3
    %v380 = vrot.slane %v375, 4
    %v381 = vrot.slane %v375, 5
    %v382 = vrot.slane %v375, 6
    %v383 = vrot.slane %v375, 7
    %v384 = vperm.slane %v375, 0
    %v385 = vperm.slane %v377, 0
    %v386 = vperm.slane %v378, 0
    %v387 = vperm.slane %v379, 0
    %v388 = vperm.slane %v380, 0
    %v389 = vperm.slane %v381, 0
    %v390 = vperm.slane %v382, 0
    %v391 = vperm.slane %v383, 0
    %v400 = vmul.f32 %v373, %v384
    %v401 = vmul.f32 %v373, %v385
    %v402 = vmul.f32 %v373, %v386
    %v403 = vmul.f32 %v373, %v387
    %v404 = vmul.f32 %v373, %v388
    %v405 = vmul.f32 %v373, %v389
    %v406 = vmul.f32 %v373, %v390
    %v407 = vmul.f32 %v373, %v391
    %v408 = vsub.f32 1.0, %v400
    %v409 = vsub.f32 1.0, %v401
    %v410 = vsub.f32 1.0, %v402
    %v411 = vsub.f32 1.0, %v403
    %v412 = vsub.f32 1.0, %v404
    %v413 = vsub.f32 1.0, %v405
    %v414 = vsub.f32 1.0, %v406
    %v415 = vsub.f32 1.0, %v407
    %v416 = vmul.f32 %v363, %v408
    %v417 = vmul.f32 %v364, %v409
    %v418 = vmul.f32 %v365, %v410
    %v419 = vmul.f32 %v366, %v411
    %v420 = vmul.f32 %v367, %v412
    %v421 = vmul.f32 %v368, %v413
    %v422 = vmul.f32 %v369, %v414
    %v423 = vmul.f32 %v370, %v415
    %v424 = vmul.f32 %v318, %v416
    %v425 = vmul.f32 %v319, %v417
    %v426 = vmul.f32 %v320, %v418
    %v427 = vmul.f32 %v321, %v419
    %v428 = vmul.f32 %v322, %v420
    %v429 = vmul.f32 %v323, %v421
    %v430 = vmul.f32 %v324, %v422
    %v431 = vmul.f32 %v325, %v423
    %v432 = vlog2.pop %v424
    %v433 = vmul.f32 %v432, 0.6931472
    %v434 = vlog2.pop %v425
    %v435 = vmul.f32 %v434, 0.6931472
    %v436 = vlog2.pop %v426
    %v437 = vmul.f32 %v436, 0.6931472
    %v438 = vlog2.pop %v427
    %v439 = vmul.f32 %v438, 0.6931472
    %v440 = vlog2.pop %v428
    %v441 = vmul.f32 %v440, 0.6931472
    %v442 = vlog2.pop %v429
    %v443 = vmul.f32 %v442, 0.6931472
    %v444 = vlog2.pop %v430
    %v445 = vmul.f32 %v444, 0.6931472
    %v446 = vlog2.pop %v431
    %v447 = vmul.f32 %v446, 0.6931472
    %v448 = vsub.f32 %v433, 1.0
    %v449 = vsub.f32 %v435, 1.0
    %v450 = vsub.f32 %v437, 1.0
    %v451 = vsub.f32 %v439, 1.0
    %v452 = vsub.f32 %v441, 1.0
    %v453 = vsub.f32 %v443, 1.0
    %v454 = vsub.f32 %v445, 1.0
    %v455 = vsub.f32 %v447, 1.0
    %v456 = vrcp.pop %v448
    %v457 = vmul.f32 %v448, %v456
    %v458 = vsub.f32 1.0, %v457
    %v459 = vmul.f32 %v456, %v458
    %v460 = vadd.f32 %v456, %v459
    %vm461 = vweird.f32 %v448
    %vm462 = vweird.f32 %v456
    %vm463 = vmor %vm461, %vm462
    %v464 = vsel %vm463, %v456, %v460
    %v465 = vand.u32 2147483647, %v448
    %vm466 = vcmp.eq.f32.partialorder %v465, 8.507059e+37
    %v467 = vand.u32 %v448, 2147483648
    %v468 = vor.u32 1.1754944e-38, %v467
    %v469 = vsel %vm466, %v468, %v464
    %v470 = vrcp.pop %v449
    %v471 = vmul.f32 %v449, %v470
    %v472 = vsub.f32 1.0, %v471
    %v473 = vmul.f32 %v470, %v472
    %v474 = vadd.f32 %v470, %v473
    %vm475 = vweird.f32 %v449
    %vm476 = vweird.f32 %v470
    %vm477 = vmor %vm475, %vm476
    %v478 = vsel %vm477, %v470, %v474
    %v479 = vand.u32 2147483647, %v449
    %vm480 = vcmp.eq.f32.partialorder %v479, 8.507059e+37
    %v481 = vand.u32 %v449, 2147483648
    %v482 = vor.u32 1.1754944e-38, %v481
    %v483 = vsel %vm480, %v482, %v478
    %v484 = vrcp.pop %v450
    %v485 = vmul.f32 %v450, %v484
    %v486 = vsub.f32 1.0, %v485
    %v487 = vmul.f32 %v484, %v486
    %v488 = vadd.f32 %v484, %v487
    %vm489 = vweird.f32 %v450
    %vm490 = vweird.f32 %v484
    %vm491 = vmor %vm489, %vm490
    %v492 = vsel %vm491, %v484, %v488
    %v493 = vand.u32 2147483647, %v450
    %vm494 = vcmp.eq.f32.partialorder %v493, 8.507059e+37
    %v495 = vand.u32 %v450, 2147483648
    %v496 = vor.u32 1.1754944e-38, %v495
    %v497 = vsel %vm494, %v496, %v492
    %v498 = vrcp.pop %v451
    %v499 = vmul.f32 %v451, %v498
    %v500 = vsub.f32 1.0, %v499
    %v501 = vmul.f32 %v498, %v500
    %v502 = vadd.f32 %v498, %v501
    %vm503 = vweird.f32 %v451
    %vm504 = vweird.f32 %v498
    %vm505 = vmor %vm503, %vm504
    %v506 = vsel %vm505, %v498, %v502
    %v507 = vand.u32 2147483647, %v451
    %vm508 = vcmp.eq.f32.partialorder %v507, 8.507059e+37
    %v509 = vand.u32 %v451, 2147483648
    %v510 = vor.u32 1.1754944e-38, %v509
    %v511 = vsel %vm508, %v510, %v506
    %v512 = vrcp.pop %v452
    %v513 = vmul.f32 %v452, %v512
    %v514 = vsub.f32 1.0, %v513
    %v515 = vmul.f32 %v512, %v514
    %v516 = vadd.f32 %v512, %v515
    %vm517 = vweird.f32 %v452
    %vm518 = vweird.f32 %v512
    %vm519 = vmor %vm517, %vm518
    %v520 = vsel %vm519, %v512, %v516
    %v521 = vand.u32 2147483647, %v452
    %vm522 = vcmp.eq.f32.partialorder %v521, 8.507059e+37
    %v523 = vand.u32 %v452, 2147483648
    %v524 = vor.u32 1.1754944e-38, %v523
    %v525 = vsel %vm522, %v524, %v520
    %v526 = vrcp.pop %v453
    %v527 = vmul.f32 %v453, %v526
    %v528 = vsub.f32 1.0, %v527
    %v529 = vmul.f32 %v526, %v528
    %v530 = vadd.f32 %v526, %v529
    %vm531 = vweird.f32 %v453
    %vm532 = vweird.f32 %v526
    %vm533 = vmor %vm531, %vm532
    %v534 = vsel %vm533, %v526, %v530
    %v535 = vand.u32 2147483647, %v453
    %vm536 = vcmp.eq.f32.partialorder %v535, 8.507059e+37
    %v537 = vand.u32 %v453, 2147483648
    %v538 = vor.u32 1.1754944e-38, %v537
    %v539 = vsel %vm536, %v538, %v534
    %v540 = vrcp.pop %v454
    %v541 = vmul.f32 %v454, %v540
    %v542 = vsub.f32 1.0, %v541
    %v543 = vmul.f32 %v540, %v542
    %v544 = vadd.f32 %v540, %v543
    %vm545 = vweird.f32 %v454
    %vm546 = vweird.f32 %v540
    %vm547 = vmor %vm545, %vm546
    %v548 = vsel %vm547, %v540, %v544
    %v549 = vand.u32 2147483647, %v454
    %vm550 = vcmp.eq.f32.partialorder %v549, 8.507059e+37
    %v551 = vand.u32 %v454, 2147483648
    %v552 = vor.u32 1.1754944e-38, %v551
    %v553 = vsel %vm550, %v552, %v548
    %v554 = vrcp.pop %v455
    %v555 = vmul.f32 %v455, %v554
    %v556 = vsub.f32 1.0, %v555
    %v557 = vmul.f32 %v554, %v556
    %v558 = vadd.f32 %v554, %v557
    %vm559 = vweird.f32 %v455
    %vm560 = vweird.f32 %v554
    %vm561 = vmor %vm559, %vm560
    %v562 = vsel %vm561, %v554, %v558
    %v563 = vand.u32 2147483647, %v455
    %vm564 = vcmp.eq.f32.partialorder %v563, 8.507059e+37
    %v565 = vand.u32 %v455, 2147483648
    %v566 = vor.u32 1.1754944e-38, %v565
    %v567 = vsel %vm564, %v566, %v562
    %v568 = vsub.f32 0.0, %v469
    %v569 = vsub.f32 0.0, %v483
    %v570 = vsub.f32 0.0, %v497
    %v571 = vsub.f32 0.0, %v511
    %v572 = vsub.f32 0.0, %v525
    %v573 = vsub.f32 0.0, %v539
    %v574 = vsub.f32 0.0, %v553
    %v575 = vsub.f32 0.0, %v567
    %v576 = vld [vmem:[%s0] sm:$0xff]
    %v577 = vld [vmem:[%s0 + $0x8] sm:$0xff]
    %v578 = vld [vmem:[%s0 + $0x10] sm:$0xff]
    %v579 = vld [vmem:[%s0 + $0x18] sm:$0xff]
    %v580 = vld [vmem:[%s0 + $0x20] sm:$0xff]
    %v581 = vld [vmem:[%s0 + $0x28] sm:$0xff]
    %v582 = vld [vmem:[%s0 + $0x30] sm:$0xff]
    %v583 = vld [vmem:[%s0 + $0x38] sm:$0xff]
    %v584 = vmul.f32 %v576, %v568
    %v585 = vmul.f32 %v577, %v569
    %v586 = vmul.f32 %v578, %v570
    %v587 = vmul.f32 %v579, %v571
    %v588 = vmul.f32 %v580, %v572
    %v589 = vmul.f32 %v581, %v573
    %v590 = vmul.f32 %v582, %v574
    %v591 = vmul.f32 %v583, %v575
    %v592 = vld [vmem:[%s3] sm:$0xff]
    %v594 = vrot.slane %v592, 1
    %v595 = vrot.slane %v592, 2
    %v596 = vrot.slane %v592, 3
    %v597 = vrot.slane %v592, 4
    %v598 = vrot.slane %v592, 5
    %v599 = vrot.slane %v592, 6
    %v600 = vrot.slane %v592, 7
    %v601 = vperm.slane %v592, 0
    %v602 = vperm.slane %v594, 0
    %v603 = vperm.slane %v595, 0
    %v604 = vperm.slane %v596, 0
    %v605 = vperm.slane %v597, 0
    %v606 = vperm.slane %v598, 0
    %v607 = vperm.slane %v599, 0
    %v608 = vperm.slane %v600, 0
    %v617 = vmul.f32 %v584, %v601
    %v618 = vmul.f32 %v585, %v602
    %v619 = vmul.f32 %v586, %v603
    %v620 = vmul.f32 %v587, %v604
    %v621 = vmul.f32 %v588, %v605
    %v622 = vmul.f32 %v589, %v606
    %v623 = vmul.f32 %v590, %v607
    %v624 = vmul.f32 %v591, %v608
    %v625 = vsub.f32 1.0, %v617
    %v626 = vsub.f32 1.0, %v618
    %v627 = vsub.f32 1.0, %v619
    %v628 = vsub.f32 1.0, %v620
    %v629 = vsub.f32 1.0, %v621
    %v630 = vsub.f32 1.0, %v622
    %v631 = vsub.f32 1.0, %v623
    %v632 = vsub.f32 1.0, %v624
    %v633 = vmul.f32 %v625, %v626
    %v634 = vmul.f32 %v633, %v627
    %v635 = vmul.f32 %v634, %v628
    %v636 = vmul.f32 %v635, %v629
    %v637 = vmul.f32 %v636, %v630
    %v638 = vmul.f32 %v637, %v631
    %v639 = vmul.f32 %v638, %v632
    %v640 = vlog2.pop %v639
    %v641 = vmul.f32 %v640, 0.6931472
    %v642 = vsub.f32 %v641, 1.0
    %v643 = vrcp.pop %v642
    %v644 = vmul.f32 %v642, %v643
    %v645 = vsub.f32 1.0, %v644
    %v646 = vmul.f32 %v643, %v645
    %v647 = vadd.f32 %v643, %v646
    %vm648 = vweird.f32 %v642
    %vm649 = vweird.f32 %v643
    %vm650 = vmor %vm648, %vm649
    %v651 = vsel %vm650, %v643, %v647
    %v652 = vand.u32 2147483647, %v642
    %vm653 = vcmp.eq.f32.partialorder %v652, 8.507059e+37
    %v654 = vand.u32 %v642, 2147483648
    %v655 = vor.u32 1.1754944e-38, %v654
    %v656 = vsel %vm653, %v655, %v651
    %v657 = vadd.f32 %v656, 1.0
    %658 = vst [vmem:[#allocation2] sm:$0xff] %v657
    // Predicated region
    $region18: #{until_forward.1} parent=1 // pred_check
      _
    $region19: #{until_forward.1} parent=1 // pred_check_branch
      %660 = sbr.rel (0) target = $region21
    $region20: #{until_forward.1} parent=1 // pred_region
      %662 = vsyncadd [#allocation3], 0
      %s664 = sshll.u32 [#allocation2], 4
      %s665 = int_to_ptr.vmem [resolvable:$true] %s664
      %s666 = sshll.u32 %s4, 4
      %s667 = int_to_ptr.hbm [resolvable:$true] %s666
      %669 = dma.vmem_to_hbm [thread:$0]  %s665, 128, %s667, [#allocation3]
    $region21: #{until_forward.1} parent=1 // pred_fallthru
      _
    // Predicated region
    $region22: #{until_forward.1} parent=1 // pred_check
      _
    $region23: #{until_forward.1} parent=1 // pred_check_branch
      %671 = sbr.rel (0) target = $region25
    $region24: #{until_forward.1} parent=1 // pred_region
      %673 = dma.done [#allocation3], 128
    $region25: #{until_forward.1} parent=1 // pred_fallthru
      _
    %674 = vsyncpa [#allocation3], 1

</llo_original>
